<compile_context>
chip_gen: v5e
topology: v5e:2x2
jax: 0.10.0
libtpu: 0.0.40
codegen_flags: <defaults>
</compile_context>

<pallas_src>
import numpy as np
import jax
import jax.numpy as jnp
from jax.experimental import pallas as pl
from jax.experimental.pallas import tpu as pltpu


def _round_up(x: int, m: int) -> int:
    return (x + m - 1) // m * m


def _handshaking_kernel(rows_ref, cols_ref, seq_ref, wi_ref, wj_ref, b_ref,
                        o_ref, a_sc, bp_sc):
    # rows_ref/cols_ref: (TILE_T, 1) int32 -- pair (i, j) indices for this tile
    # seq_ref: (S, H)    wi_ref/wj_ref: (H, H)    b_ref: (1, H)
    # o_ref:   (TILE_T, H)
    # a_sc/bp_sc: (S, H) f32 per-token projections, resident in VMEM across the T tiles.
    t = pl.program_id(1)

    @pl.when(t == 0)
    def _():
        x = seq_ref[...]                                            # (S, H)
        a_sc[...] = jnp.dot(x, wi_ref[...], preferred_element_type=jnp.float32)
        bp_sc[...] = jnp.dot(x, wj_ref[...], preferred_element_type=jnp.float32)

    tile_t = o_ref.shape[0]
    s = a_sc.shape[0]

    # One-hot gather matrices (TILE_T, S): row r selects token rows_ref[r] / cols_ref[r].
    tok = jax.lax.broadcasted_iota(jnp.int32, (tile_t, s), 1)
    oh_rows = (rows_ref[...] == tok).astype(jnp.float32)            # (TILE_T, S)
    oh_cols = (cols_ref[...] == tok).astype(jnp.float32)            # (TILE_T, S)

    left = jnp.dot(oh_rows, a_sc[...], preferred_element_type=jnp.float32)   # (TILE_T, H)
    right = jnp.dot(oh_cols, bp_sc[...], preferred_element_type=jnp.float32) # (TILE_T, H)

    y = left + right + b_ref[...]                                   # f32, bias broadcast
    o_ref[...] = (y * jax.nn.sigmoid(y)).astype(o_ref.dtype)        # SiLU


def handshaking_forward(seq_hiddens, weight, bias, *, tile_t: int = 512):
    """seq_hiddens: (B, S, H) f32
       weight:      (H, 2H)   f32  (PyTorch nn.Linear layout: out_features x in_features)
       bias:        (H,)      f32
       returns:     (B, T, H) f32 with T = S*(S+1)/2, pairs (i,j), i<=j, row-major order.
    """
    B, S, H = seq_hiddens.shape
    T = S * (S + 1) // 2

    # Tile the pair dimension.  tile_t=512 keeps (out + seq + weights + scratch) well inside
    # v7x's 32 MiB scoped VMEM at realistic (S, H); on v6e/v5e a larger tile_t can be passed.
    TILE_T = min(tile_t, _round_up(T, 8))
    T_pad = _round_up(T, TILE_T)
    num_t = T_pad // TILE_T

    # Upper-triangular pair indices, same (i<=j) row-major order as torch.nonzero(row<=col).
    rows_np, cols_np = np.triu_indices(S)
    rows = np.zeros((T_pad, 1), np.int32)
    cols = np.zeros((T_pad, 1), np.int32)
    rows[:T, 0] = rows_np
    cols[:T, 0] = cols_np
    rows = jnp.asarray(rows)
    cols = jnp.asarray(cols)

    # Split the Linear: out = [h_i, h_j] @ W.T + b  ==  h_i @ Wi + h_j @ Wj + b
    wi = weight[:, :H].T                                            # (H, H)
    wj = weight[:, H:].T                                            # (H, H)
    b2d = bias.reshape(1, H).astype(jnp.float32)

    out = pl.pallas_call(
        _handshaking_kernel,
        out_shape=jax.ShapeDtypeStruct((B, T_pad, H), seq_hiddens.dtype),
        grid=(B, num_t),
        in_specs=[
            pl.BlockSpec((TILE_T, 1), lambda b, t: (t, 0)),         # rows
            pl.BlockSpec((TILE_T, 1), lambda b, t: (t, 0)),         # cols
            pl.BlockSpec((None, S, H), lambda b, t: (b, 0, 0)),     # seq_hiddens (batch squeezed)
            pl.BlockSpec((H, H), lambda b, t: (0, 0)),              # Wi (resident)
            pl.BlockSpec((H, H), lambda b, t: (0, 0)),              # Wj (resident)
            pl.BlockSpec((1, H), lambda b, t: (0, 0)),              # bias
        ],
        out_specs=pl.BlockSpec((None, TILE_T, H), lambda b, t: (b, t, 0)),
        scratch_shapes=[
            pltpu.VMEM((S, H), jnp.float32),                        # A  = seq @ Wi
            pltpu.VMEM((S, H), jnp.float32),                        # Bp = seq @ Wj
        ],
        compiler_params=pltpu.CompilerParams(
            dimension_semantics=("parallel", "arbitrary"),
        ),
    )(rows, cols, seq_hiddens, wi, wj, b2d)

    return out[:, :T, :]


def reference_forward(seq_hiddens, weight, bias):
    """Pure-JAX reference mirroring the PyTorch module semantics (concat + Linear + SiLU)."""
    B, S, H = seq_hiddens.shape
    rows_np, cols_np = np.triu_indices(S)
    xi = seq_hiddens[:, rows_np, :]
    xj = seq_hiddens[:, cols_np, :]
    pair = jnp.concatenate([xi, xj], axis=-1)                       # (B, T, 2H)
    y = pair @ weight.T + bias
    return y * jax.nn.sigmoid(y)


if __name__ == "__main__":
    B, S, H = 2, 8, 32

    key = jax.random.PRNGKey(0)
    kx, kw, kb = jax.random.split(key, 3)

    seq_hiddens = jax.random.normal(kx, (B, S, H), dtype=jnp.float32)

    # Deterministic parameter init mimicking nn.Linear(2H, H) default (uniform +/- 1/sqrt(2H)).
    bound = 1.0 / jnp.sqrt(2.0 * H)
    weight = jax.random.uniform(kw, (H, 2 * H), jnp.float32, -bound, bound)
    bias = jax.random.uniform(kb, (H,), jnp.float32, -bound, bound)

    out = handshaking_forward(seq_hiddens, weight, bias)
    out = jax.block_until_ready(out)

    ref = reference_forward(seq_hiddens, weight, bias)
    assert out.shape == (B, S * (S + 1) // 2, H)
    assert jnp.allclose(out, ref, atol=1e-5, rtol=1e-5)

    print("KERNEL_OK")
</pallas_src>

<mosaic_0001>
module attributes {stable_mosaic.version = 11 : i64} {
  func.func @_handshaking_kernel(%arg0: i32, %arg1: i32, %arg2: memref<40x1xi32, #tpu.memory_space<vmem>>, %arg3: memref<40x1xi32, #tpu.memory_space<vmem>>, %arg4: memref<1x8x32xf32, #tpu.memory_space<vmem>>, %arg5: memref<32x32xf32, #tpu.memory_space<vmem>>, %arg6: memref<32x32xf32, #tpu.memory_space<vmem>>, %arg7: memref<1x32xf32, #tpu.memory_space<vmem>>, %arg8: memref<1x40x32xf32, #tpu.memory_space<vmem>>, %arg9: memref<8x32xf32, #tpu.memory_space<vmem>>, %arg10: memref<8x32xf32, #tpu.memory_space<vmem>>) attributes {dimension_semantics = [#tpu.dimension_semantics<parallel>, #tpu.dimension_semantics<arbitrary>], iteration_bounds = array<i64: 2, 1>, scalar_prefetch = 0 : i64, scratch_operands = 2 : i64, tpu.core_type = #tpu.core_type<tc>, window_params = [{transform_indices = @transform_0, window_bounds = array<i64: 40, 1>}, {transform_indices = @transform_1, window_bounds = array<i64: 40, 1>}, {transform_indices = @transform_2, window_bounds = array<i64: 1, 8, 32>}, {pipeline_mode = #tpu.pipeline_mode<synchronous>, transform_indices = @transform_3, window_bounds = array<i64: 32, 32>}, {pipeline_mode = #tpu.pipeline_mode<synchronous>, transform_indices = @transform_4, window_bounds = array<i64: 32, 32>}, {pipeline_mode = #tpu.pipeline_mode<synchronous>, transform_indices = @transform_5, window_bounds = array<i64: 1, 32>}, {transform_indices = @transform_6, window_bounds = array<i64: 1, 40, 32>}]} {
    %c0_i32 = arith.constant 0 : i32
    %0 = arith.cmpi eq, %arg1, %c0_i32 : i32
    %1 = arith.extui %0 : i1 to i32
    %c0_i32_0 = arith.constant 0 : i32
    %2 = arith.cmpi ne, %1, %c0_i32_0 : i32
    scf.if %2 {
      %c0_15 = arith.constant 0 : index
      %c0_16 = arith.constant 0 : index
      %c0_17 = arith.constant 0 : index
      %31 = vector.load %arg4[%c0_15, %c0_16, %c0_17] : memref<1x8x32xf32, #tpu.memory_space<vmem>>, vector<1x8x32xf32>
      %32 = vector.shape_cast %31 : vector<1x8x32xf32> to vector<8x32xf32>
      %c0_18 = arith.constant 0 : index
      %c0_19 = arith.constant 0 : index
      %33 = vector.load %arg5[%c0_18, %c0_19] : memref<32x32xf32, #tpu.memory_space<vmem>>, vector<32x32xf32>
      %cst_20 = arith.constant dense<0.000000e+00> : vector<8x32xf32>
      %34 = tpu.matmul %32, %33, %cst_20 {dimension_numbers = #tpu.dot_dimension_numbers<[1], [0], [0], [1], [0, 0, 1, 1], [], []>} : vector<8x32xf32>, vector<32x32xf32>, vector<8x32xf32> -> vector<8x32xf32>
      %c0_21 = arith.constant 0 : index
      %c0_22 = arith.constant 0 : index
      %35 = vector.load %arg9[%c0_21, %c0_22] : memref<8x32xf32, #tpu.memory_space<vmem>>, vector<8x32xf32>
      tpu.vector_store %arg9[%c0_21, %c0_22], %34 {strides = array<i32>} : memref<8x32xf32, #tpu.memory_space<vmem>>, vector<8x32xf32>,
      %c0_23 = arith.constant 0 : index
      %c0_24 = arith.constant 0 : index
      %36 = vector.load %arg6[%c0_23, %c0_24] : memref<32x32xf32, #tpu.memory_space<vmem>>, vector<32x32xf32>
      %cst_25 = arith.constant dense<0.000000e+00> : vector<8x32xf32>
      %37 = tpu.matmul %32, %36, %cst_25 {dimension_numbers = #tpu.dot_dimension_numbers<[1], [0], [0], [1], [0, 0, 1, 1], [], []>} : vector<8x32xf32>, vector<32x32xf32>, vector<8x32xf32> -> vector<8x32xf32>
      %c0_26 = arith.constant 0 : index
      %c0_27 = arith.constant 0 : index
      %38 = vector.load %arg10[%c0_26, %c0_27] : memref<8x32xf32, #tpu.memory_space<vmem>>, vector<8x32xf32>
      tpu.vector_store %arg10[%c0_26, %c0_27], %37 {strides = array<i32>} : memref<8x32xf32, #tpu.memory_space<vmem>>, vector<8x32xf32>,
    } else {
    }
    %3 = tpu.iota {dimensions = array<i32: 1>} : vector<40x8xi32>
    %c0 = arith.constant 0 : index
    %c0_1 = arith.constant 0 : index
    %4 = vector.load %arg2[%c0, %c0_1] : memref<40x1xi32, #tpu.memory_space<vmem>>, vector<40x1xi32>
    %5 = vector.broadcast %4 : vector<40x1xi32> to vector<40x8xi32>
    %6 = arith.cmpi eq, %5, %3 : vector<40x8xi32>
    %7 = arith.extui %6 : vector<40x8xi1> to vector<40x8xi32>
    %8 = arith.sitofp %7 : vector<40x8xi32> to vector<40x8xf32>
    %c0_2 = arith.constant 0 : index
    %c0_3 = arith.constant 0 : index
    %9 = vector.load %arg3[%c0_2, %c0_3] : memref<40x1xi32, #tpu.memory_space<vmem>>, vector<40x1xi32>
    %10 = vector.broadcast %9 : vector<40x1xi32> to vector<40x8xi32>
    %11 = arith.cmpi eq, %10, %3 : vector<40x8xi32>
    %12 = arith.extui %11 : vector<40x8xi1> to vector<40x8xi32>
    %13 = arith.sitofp %12 : vector<40x8xi32> to vector<40x8xf32>
    %c0_4 = arith.constant 0 : index
    %c0_5 = arith.constant 0 : index
    %14 = vector.load %arg9[%c0_4, %c0_5] : memref<8x32xf32, #tpu.memory_space<vmem>>, vector<8x32xf32>
    %cst = arith.constant dense<0.000000e+00> : vector<40x32xf32>
    %15 = tpu.matmul %8, %14, %cst {dimension_numbers = #tpu.dot_dimension_numbers<[1], [0], [0], [1], [0, 0, 1, 1], [], []>} : vector<40x8xf32>, vector<8x32xf32>, vector<40x32xf32> -> vector<40x32xf32>
    %c0_6 = arith.constant 0 : index
    %c0_7 = arith.constant 0 : index
    %16 = vector.load %arg10[%c0_6, %c0_7] : memref<8x32xf32, #tpu.memory_space<vmem>>, vector<8x32xf32>
    %cst_8 = arith.constant dense<0.000000e+00> : vector<40x32xf32>
    %17 = tpu.matmul %13, %16, %cst_8 {dimension_numbers = #tpu.dot_dimension_numbers<[1], [0], [0], [1], [0, 0, 1, 1], [], []>} : vector<40x8xf32>, vector<8x32xf32>, vector<40x32xf32> -> vector<40x32xf32>
    %18 = arith.addf %15, %17 : vector<40x32xf32>
    %c0_9 = arith.constant 0 : index
    %c0_10 = arith.constant 0 : index
    %19 = vector.load %arg7[%c0_9, %c0_10] : memref<1x32xf32, #tpu.memory_space<vmem>>, vector<1x32xf32>
    %20 = vector.broadcast %19 : vector<1x32xf32> to vector<40x32xf32>
    %21 = arith.addf %18, %20 : vector<40x32xf32>
    %22 = arith.negf %21 : vector<40x32xf32>
    %23 = math.exp %22 : vector<40x32xf32>
    %cst_11 = arith.constant 1.000000e+00 : f32
    %24 = vector.broadcast %cst_11 : f32 to vector<40x32xf32>
    %25 = arith.addf %24, %23 : vector<40x32xf32>
    %26 = arith.divf %24, %25 : vector<40x32xf32>
    %27 = arith.mulf %21, %26 : vector<40x32xf32>
    %c0_12 = arith.constant 0 : index
    %c0_13 = arith.constant 0 : index
    %c0_14 = arith.constant 0 : index
    %28 = vector.load %arg8[%c0_12, %c0_13, %c0_14] : memref<1x40x32xf32, #tpu.memory_space<vmem>>, vector<1x40x32xf32>
    %29 = vector.shape_cast %28 : vector<1x40x32xf32> to vector<40x32xf32>
    %30 = vector.shape_cast %27 : vector<40x32xf32> to vector<1x40x32xf32>
    tpu.vector_store %arg8[%c0_12, %c0_13, %c0_14], %30 {strides = array<i32>} : memref<1x40x32xf32, #tpu.memory_space<vmem>>, vector<1x40x32xf32>,
    return
  }
  func.func @transform_0(%arg0: i32, %arg1: i32) -> (i32, i32) {
    %c0_i32 = arith.constant 0 : i32
    %c0_i32_0 = arith.constant 0 : i32
    return %arg1, %c0_i32 : i32, i32
  }
  func.func @transform_1(%arg0: i32, %arg1: i32) -> (i32, i32) {
    %c0_i32 = arith.constant 0 : i32
    %c0_i32_0 = arith.constant 0 : i32
    return %arg1, %c0_i32 : i32, i32
  }
  func.func @transform_2(%arg0: i32, %arg1: i32) -> (i32, i32, i32) {
    %c0_i32 = arith.constant 0 : i32
    %c0_i32_0 = arith.constant 0 : i32
    %c0_i32_1 = arith.constant 0 : i32
    return %arg0, %c0_i32, %c0_i32_0 : i32, i32, i32
  }
  func.func @transform_3(%arg0: i32, %arg1: i32) -> (i32, i32) {
    %c0_i32 = arith.constant 0 : i32
    %c0_i32_0 = arith.constant 0 : i32
    %c0_i32_1 = arith.constant 0 : i32
    return %c0_i32, %c0_i32_0 : i32, i32
  }
  func.func @transform_4(%arg0: i32, %arg1: i32) -> (i32, i32) {
    %c0_i32 = arith.constant 0 : i32
    %c0_i32_0 = arith.constant 0 : i32
    %c0_i32_1 = arith.constant 0 : i32
    return %c0_i32, %c0_i32_0 : i32, i32
  }
  func.func @transform_5(%arg0: i32, %arg1: i32) -> (i32, i32) {
    %c0_i32 = arith.constant 0 : i32
    %c0_i32_0 = arith.constant 0 : i32
    %c0_i32_1 = arith.constant 0 : i32
    return %c0_i32, %c0_i32_0 : i32, i32
  }
  func.func @transform_6(%arg0: i32, %arg1: i32) -> (i32, i32, i32) {
    %c0_i32 = arith.constant 0 : i32
    %c0_i32_0 = arith.constant 0 : i32
    return %arg0, %arg1, %c0_i32 : i32, i32, i32
  }
}

</mosaic_0001>

<llo_original>
// kernel: tpu_custom_call.1
$region0: #{tpu_custom_call.1}
  #allocation0 [shape = 'u32[]', space=smem, size = 0x4, offset = 0x4, fixed_abs, tag = 'smem constant byte address 0x4 - core index']
  #allocation1 [shape = 'u32[72,128]{1,0:T(1,128)}', space=vmem, size = 0x9000, scoped, tag = 'internal scratch']
  #allocation2 [shape = 'f32[8,32]{1,0:T(8,128)}', space=vmem, size = 0x1000, scoped, tag = 'scratch operand']
  #allocation3 [shape = 'f32[8,32]{1,0:T(8,128)}', space=vmem, size = 0x1000, scoped, tag = 'scratch operand']
  %s0 = inlined_call_operand.vmem [shape: s32[40,1], index: 0, kind: input, shape index: {}]
  %s1 = inlined_call_operand.vmem [shape: s32[40,1], index: 1, kind: input, shape index: {}]
  %s2 = inlined_call_operand.vmem [shape: f32[2,8,32], index: 2, kind: input, shape index: {}]
  %s3 = inlined_call_operand.vmem [shape: f32[32,32], index: 3, kind: input, shape index: {}]
  %s4 = inlined_call_operand.vmem [shape: f32[32,32], index: 4, kind: input, shape index: {}]
  %s5 = inlined_call_operand.vmem [shape: f32[1,32], index: 5, kind: input, shape index: {}]
  %s6 = inlined_call_operand.vmem [shape: f32[2,40,32], index: 6, kind: output, shape index: {}]
  %s7 = sld [smem:[#allocation0]]
  $region61: #{tpu_custom_call.1} parent=0
    _
  %s9 = ssub.s32 1, %s7
  %s10 = scalar_select 0, %s9, %s7
  loop: start=0, step=1, limit=4
  $region2: #{tpu_custom_call.1} parent=0 // loop_pre_header
    _
  $region3: #{tpu_custom_call.1} parent=0 // loop_header
    %s12 = sphi 0, %s16
    %p13 = scmp.ge.s32.totalorder %s12, 4
    %s19 = sphi 0, %s31
    %s20 = sphi 0, %s27
    %s21 = sphi 0, %s19
    %s22 = sphi 0, %s20
    %s23 = sphi 0, %s21
    %s24 = sphi 0, %s22
    %s34 = sphi 0, %s36
    %s37 = sphi 0, %s34
    %s38 = sphi 0, %s37
    %s54 = sphi 0, %s38
    %s60 = sphi 0, %s62
    %s63 = sphi 0, %s60
    %s64 = sphi 0, %s63
    %s80 = sphi 0, %s64
    %s86 = sphi 0, %s88
    %s89 = sphi 0, %s86
    %s90 = sphi 0, %s89
    %s106 = sphi 0, %s90
    %s110 = sphi 0, %s110
    %s112 = sphi 0, %s110
    %s113 = sphi 0, %s112
    %s127 = sphi 0, %s113
    %s131 = sphi 0, %s131
    %s133 = sphi 0, %s131
    %s134 = sphi 0, %s133
    %s148 = sphi 0, %s134
    %s152 = sphi 0, %s152
    %s154 = sphi 0, %s152
    %s155 = sphi 0, %s154
    %s169 = sphi 0, %s155
    %s177 = sphi 0, %s179
    %s180 = sphi 0, %s177
    %s181 = sphi 0, %s180
    %s197 = sphi 0, %s181
  $region4: #{tpu_custom_call.1} parent=0 // loop_header_branch
    %15 = sbr.rel (%p13) target = $region8
  $region5: #{tpu_custom_call.1} parent=0 // loop_body
    %s17 = ssub.s32 %s12, 1
    %s18 = ssub.s32 %s12, 2
    %s25 = sadd.s32 1, %s20
    %p26 = scmp.ge.s32.totalorder %s25, 1
    %s27 = scalar_select %p26, 0, %s25
    %s28 = sadd.s32 1, %s19
    %s29 = scalar_select %p26, %s28, %s19
    %p30 = scmp.ge.s32.totalorder %s29, 2
    %s31 = scalar_select %p30, 0, %s29
    %s32 = ssub.s32 %s20, %s27
    %p33 = scmp.eq.s32.totalorder %s32, 0
    %s35 = sadd.s32 %s34, 1
    %s36 = scalar_select %p33, %s34, %s35
    %p39 = pneg %p33
    %p40 = scmp.eq.s32.totalorder %s12, 1
    %p41 = por %p39, %p40
    %p42 = scmp.ne.s32.totalorder %s34, %s37
    %p43 = scmp.eq.s32.totalorder %s12, 0
    %p44 = por %p42, %p43
    %p45 = scmp.ne.s32.totalorder %s34, %s37
    %p46 = scmp.eq.s32.totalorder %s17, 1
    %p47 = por %p45, %p46
    %p48 = scmp.ne.s32.totalorder %s37, %s38
    %p49 = scmp.eq.s32.totalorder %s17, 0
    %p50 = por %p48, %p49
    %p51 = scmp.ne.s32.totalorder %s37, %s38
    %p52 = scmp.eq.s32.totalorder %s18, 1
    %p53 = por %p51, %p52
    %p55 = scmp.ne.s32.totalorder %s38, %s54
    %p56 = scmp.eq.s32.totalorder %s18, 0
    %p57 = por %p55, %p56
    %s58 = ssub.s32 %s20, %s27
    %p59 = scmp.eq.s32.totalorder %s58, 0
    %s61 = sadd.s32 %s60, 1
    %s62 = scalar_select %p59, %s60, %s61
    %p65 = pneg %p59
    %p66 = scmp.eq.s32.totalorder %s12, 1
    %p67 = por %p65, %p66
    %p68 = scmp.ne.s32.totalorder %s60, %s63
    %p69 = scmp.eq.s32.totalorder %s12, 0
    %p70 = por %p68, %p69
    %p71 = scmp.ne.s32.totalorder %s60, %s63
    %p72 = scmp.eq.s32.totalorder %s17, 1
    %p73 = por %p71, %p72
    %p74 = scmp.ne.s32.totalorder %s63, %s64
    %p75 = scmp.eq.s32.totalorder %s17, 0
    %p76 = por %p74, %p75
    %p77 = scmp.ne.s32.totalorder %s63, %s64
    %p78 = scmp.eq.s32.totalorder %s18, 1
    %p79 = por %p77, %p78
    %p81 = scmp.ne.s32.totalorder %s64, %s80
    %p82 = scmp.eq.s32.totalorder %s18, 0
    %p83 = por %p81, %p82
    %s84 = ssub.s32 %s19, %s31
    %p85 = scmp.eq.s32.totalorder %s84, 0
    %s87 = sadd.s32 %s86, 1
    %s88 = scalar_select %p85, %s86, %s87
    %p91 = pneg %p85
    %p92 = scmp.eq.s32.totalorder %s12, 1
    %p93 = por %p91, %p92
    %p94 = scmp.ne.s32.totalorder %s86, %s89
    %p95 = scmp.eq.s32.totalorder %s12, 0
    %p96 = por %p94, %p95
    %p97 = scmp.ne.s32.totalorder %s86, %s89
    %p98 = scmp.eq.s32.totalorder %s17, 1
    %p99 = por %p97, %p98
    %p100 = scmp.ne.s32.totalorder %s89, %s90
    %p101 = scmp.eq.s32.totalorder %s17, 0
    %p102 = por %p100, %p101
    %p103 = scmp.ne.s32.totalorder %s89, %s90
    %p104 = scmp.eq.s32.totalorder %s18, 1
    %p105 = por %p103, %p104
    %p107 = scmp.ne.s32.totalorder %s90, %s106
    %p108 = scmp.eq.s32.totalorder %s18, 0
    %p109 = por %p107, %p108
    %s111 = sadd.s32 %s110, 1
    %p114 = scmp.eq.s32.totalorder %s12, 1
    %p115 = scmp.ne.s32.totalorder %s110, %s112
    %p116 = scmp.eq.s32.totalorder %s12, 0
    %p117 = por %p115, %p116
    %p118 = scmp.ne.s32.totalorder %s110, %s112
    %p119 = scmp.eq.s32.totalorder %s17, 1
    %p120 = por %p118, %p119
    %p121 = scmp.ne.s32.totalorder %s112, %s113
    %p122 = scmp.eq.s32.totalorder %s17, 0
    %p123 = por %p121, %p122
    %p124 = scmp.ne.s32.totalorder %s112, %s113
    %p125 = scmp.eq.s32.totalorder %s18, 1
    %p126 = por %p124, %p125
    %p128 = scmp.ne.s32.totalorder %s113, %s127
    %p129 = scmp.eq.s32.totalorder %s18, 0
    %p130 = por %p128, %p129
    %s132 = sadd.s32 %s131, 1
    %p135 = scmp.eq.s32.totalorder %s12, 1
    %p136 = scmp.ne.s32.totalorder %s131, %s133
    %p137 = scmp.eq.s32.totalorder %s12, 0
    %p138 = por %p136, %p137
    %p139 = scmp.ne.s32.totalorder %s131, %s133
    %p140 = scmp.eq.s32.totalorder %s17, 1
    %p141 = por %p139, %p140
    %p142 = scmp.ne.s32.totalorder %s133, %s134
    %p143 = scmp.eq.s32.totalorder %s17, 0
    %p144 = por %p142, %p143
    %p145 = scmp.ne.s32.totalorder %s133, %s134
    %p146 = scmp.eq.s32.totalorder %s18, 1
    %p147 = por %p145, %p146
    %p149 = scmp.ne.s32.totalorder %s134, %s148
    %p150 = scmp.eq.s32.totalorder %s18, 0
    %p151 = por %p149, %p150
    %s153 = sadd.s32 %s152, 1
    %p156 = scmp.eq.s32.totalorder %s12, 1
    %p157 = scmp.ne.s32.totalorder %s152, %s154
    %p158 = scmp.eq.s32.totalorder %s12, 0
    %p159 = por %p157, %p158
    %p160 = scmp.ne.s32.totalorder %s152, %s154
    %p161 = scmp.eq.s32.totalorder %s17, 1
    %p162 = por %p160, %p161
    %p163 = scmp.ne.s32.totalorder %s154, %s155
    %p164 = scmp.eq.s32.totalorder %s17, 0
    %p165 = por %p163, %p164
    %p166 = scmp.ne.s32.totalorder %s154, %s155
    %p167 = scmp.eq.s32.totalorder %s18, 1
    %p168 = por %p166, %p167
    %p170 = scmp.ne.s32.totalorder %s155, %s169
    %p171 = scmp.eq.s32.totalorder %s18, 0
    %p172 = por %p170, %p171
    %s173 = ssub.s32 %s19, %s31
    %s174 = ssub.s32 %s20, %s27
    %s175 = sor.u32 %s173, %s174
    %p176 = scmp.eq.s32.totalorder %s175, 0
    %s178 = sadd.s32 %s177, 1
    %s179 = scalar_select %p176, %s177, %s178
    %p182 = pneg %p176
    %p183 = scmp.eq.s32.totalorder %s12, 1
    %p184 = por %p182, %p183
    %p185 = scmp.ne.s32.totalorder %s177, %s180
    %p186 = scmp.eq.s32.totalorder %s12, 0
    %p187 = por %p185, %p186
    %p188 = scmp.ne.s32.totalorder %s177, %s180
    %p189 = scmp.eq.s32.totalorder %s17, 1
    %p190 = por %p188, %p189
    %p191 = scmp.ne.s32.totalorder %s180, %s181
    %p192 = scmp.eq.s32.totalorder %s17, 0
    %p193 = por %p191, %p192
    %p194 = scmp.ne.s32.totalorder %s180, %s181
    %p195 = scmp.eq.s32.totalorder %s18, 1
    %p196 = por %p194, %p195
    %p198 = scmp.ne.s32.totalorder %s181, %s197
    %p199 = scmp.eq.s32.totalorder %s18, 0
    %p200 = por %p198, %p199
    %p201 = scmp.le.s32.totalorder 1, %s12
    %p202 = scmp.lt.s32.totalorder %s12, 3
    %p203 = pnand %p201, %p202
    %p204 = pneg %p203
    // Predicated region
    $region9: #{tpu_custom_call.1} parent=5 // pred_check
      _
    $region10: #{tpu_custom_call.1} parent=5 // pred_check_branch
      %206 = sbr.rel (%p203) target = $region12
    $region11: #{tpu_custom_call.1} parent=5 // pred_region
      %s207 = ssub.s32 %s12, 1
      // Predicated region
      $region13: #{tpu_custom_call.1} parent=11 // pred_check
        %p208 = pneg %p50
      $region14: #{tpu_custom_call.1} parent=11 // pred_check_branch
        %210 = sbr.rel (%p208) target = $region16
      $region15: #{tpu_custom_call.1} parent=11 // pred_region
        %s211 = smul.u32 5, %s22
        %p212 = scmp.lt.s32.totalorder %s211, 4
        %s213 = scalar_select %p212, %s211, 4
        %s214 = smul.addr %s213, 8
        %s215 = scalar_lea.vmem %s0, %s214
        %s216 = smul.u32 5, %s22
      $region16: #{tpu_custom_call.1} parent=11 // pred_fallthru
        _
      // Predicated region
      $region17: #{tpu_custom_call.1} parent=11 // pred_check
        %p217 = pneg %p76
      $region18: #{tpu_custom_call.1} parent=11 // pred_check_branch
        %219 = sbr.rel (%p217) target = $region20
      $region19: #{tpu_custom_call.1} parent=11 // pred_region
        %s220 = smul.u32 5, %s22
        %p221 = scmp.lt.s32.totalorder %s220, 4
        %s222 = scalar_select %p221, %s220, 4
        %s223 = smul.addr %s222, 8
        %s224 = scalar_lea.vmem %s1, %s223
        %s225 = smul.u32 5, %s22
      $region20: #{tpu_custom_call.1} parent=11 // pred_fallthru
        _
      // Predicated region
      $region21: #{tpu_custom_call.1} parent=11 // pred_check
        %p226 = pneg %p123
      $region22: #{tpu_custom_call.1} parent=11 // pred_check_branch
        %228 = sbr.rel (%p226) target = $region24
      $region23: #{tpu_custom_call.1} parent=11 // pred_region
        _
      $region24: #{tpu_custom_call.1} parent=11 // pred_fallthru
        _
      // Predicated region
      $region25: #{tpu_custom_call.1} parent=11 // pred_check
        %p229 = pneg %p144
      $region26: #{tpu_custom_call.1} parent=11 // pred_check_branch
        %231 = sbr.rel (%p229) target = $region28
      $region27: #{tpu_custom_call.1} parent=11 // pred_region
        _
      $region28: #{tpu_custom_call.1} parent=11 // pred_fallthru
        _
      // Predicated region
      $region29: #{tpu_custom_call.1} parent=11 // pred_check
        %p232 = pneg %p165
      $region30: #{tpu_custom_call.1} parent=11 // pred_check_branch
        %234 = sbr.rel (%p232) target = $region32
      $region31: #{tpu_custom_call.1} parent=11 // pred_region
        _
      $region32: #{tpu_custom_call.1} parent=11 // pred_fallthru
        _
    $region12: #{tpu_custom_call.1} parent=5 // pred_fallthru
      _
    %p235 = scmp.lt.s32.totalorder %s12, 2
    // Predicated region
    $region33: #{tpu_custom_call.1} parent=5 // pred_check
      %p236 = pneg %p235
    $region34: #{tpu_custom_call.1} parent=5 // pred_check_branch
      %238 = sbr.rel (%p236) target = $region36
    $region35: #{tpu_custom_call.1} parent=5 // pred_region
      // Predicated region
      $region37: #{tpu_custom_call.1} parent=35 // pred_check
        %p239 = pneg %p96
      $region38: #{tpu_custom_call.1} parent=35 // pred_check_branch
        %241 = sbr.rel (%p239) target = $region40
      $region39: #{tpu_custom_call.1} parent=35 // pred_region
        %p242 = scmp.lt.s32.totalorder %s19, 1
        %s243 = scalar_select %p242, %s19, 1
        %s244 = smul.addr %s243, 8
        %s245 = scalar_lea.vmem %s2, %s244
      $region40: #{tpu_custom_call.1} parent=35 // pred_fallthru
        _
    $region36: #{tpu_custom_call.1} parent=5 // pred_fallthru
      _
    %p246 = scmp.le.s32.totalorder 1, %s12
    %p247 = scmp.lt.s32.totalorder %s12, 3
    %p248 = pnand %p246, %p247
    %p249 = pneg %p248
    // Predicated region
    $region41: #{tpu_custom_call.1} parent=5 // pred_check
      _
    $region42: #{tpu_custom_call.1} parent=5 // pred_check_branch
      %251 = sbr.rel (%p248) target = $region44
    $region43: #{tpu_custom_call.1} parent=5 // pred_region
      %s252 = ssub.s32 %s12, 1
      %s253 = smul.u32 5, %s22
      %p254 = scmp.lt.s32.totalorder %s253, 4
      %s255 = scalar_select %p254, %s253, 4
      %s256 = smul.addr %s255, 8
      %s257 = scalar_lea.vmem %s0, %s256
      %p258 = pneg %p50
      %p259 = pneg %p47
      %s260 = smul.u32 5, %s22
      %p261 = scmp.lt.s32.totalorder %s260, 4
      %s262 = scalar_select %p261, %s260, 4
      %s263 = smul.addr %s262, 8
      %s264 = scalar_lea.vmem %s1, %s263
      %p265 = pneg %p76
      %p266 = pneg %p73
      %p267 = scmp.lt.s32.totalorder %s21, 1
      %s268 = scalar_select %p267, %s21, 1
      %s269 = smul.addr %s268, 8
      %s270 = scalar_lea.vmem %s2, %s269
      %p271 = pneg %p102
      %p272 = pneg %p99
      %p273 = pneg %p123
      %p274 = pneg %p120
      %p275 = pneg %p144
      %p276 = pneg %p141
      %p277 = pneg %p165
      %p278 = pneg %p162
      %p279 = pneg %p193
      %p280 = pneg %p190
      %s281 = smul.u32 5, %s22
      %p282 = scmp.lt.s32.totalorder %s21, 1
      %s283 = scalar_select %p282, %s21, 1
      %p284 = scmp.lt.s32.totalorder %s281, 4
      %s285 = scalar_select %p284, %s281, 4
      %s286 = smul.addr %s283, 5
      %s287 = sadd.s32 %s285, %s286
      %s288 = smul.addr %s287, 8
      %s289 = scalar_lea.vmem %s6, %s288
      %s290 = smul.u32 5, %s22
      %p291 = scmp.lt.s32.totalorder %s290, 4
      %s292 = scalar_select %p291, %s290, 4
      %s293 = smul.addr %s292, 8
      %s294 = scalar_lea.vmem %s0, %s293
      %s295 = smul.u32 5, %s22
      %s296 = smul.u32 5, %s22
      %p297 = scmp.lt.s32.totalorder %s296, 4
      %s298 = scalar_select %p297, %s296, 4
      %s299 = smul.addr %s298, 8
      %s300 = scalar_lea.vmem %s1, %s299
      %s301 = smul.u32 5, %s22
      %p302 = scmp.lt.s32.totalorder %s21, 1
      %s303 = scalar_select %p302, %s21, 1
      %s304 = smul.addr %s303, 8
      %s305 = scalar_lea.vmem %s2, %s304
      %s306 = smul.u32 5, %s22
      %p307 = scmp.lt.s32.totalorder %s21, 1
      %s308 = scalar_select %p307, %s21, 1
      %p309 = scmp.lt.s32.totalorder %s306, 4
      %s310 = scalar_select %p309, %s306, 4
      %s311 = smul.addr %s308, 5
      %s312 = sadd.s32 %s310, %s311
      %s313 = smul.addr %s312, 8
      %s314 = scalar_lea.vmem %s6, %s313
      %s315 = smul.u32 5, %s22
      %p316 = scmp.eq.s32.totalorder %s22, 0
      // Predicated region
      $region45: #{tpu_custom_call.1} parent=43 // pred_check
        %p317 = pneg %p316
      $region46: #{tpu_custom_call.1} parent=43 // pred_check_branch
        %319 = sbr.rel (%p317) target = $region48
      $region47: #{tpu_custom_call.1} parent=43 // pred_region
        %v320 = vld [vmem:[%s305] sm:$0xff]
        %v321 = vld [vmem:[%s3] sm:$0xff]
        %v322 = vld [vmem:[%s3 + $0x8] sm:$0xff]
        %v323 = vld [vmem:[%s3 + $0x10] sm:$0xff]
        %v324 = vld [vmem:[%s3 + $0x18] sm:$0xff]
        %vm325 = vcmask 261120
        %v327 = vsel %vm325, %v320, 0
        %329 = vmatpush.msra.mxu0 0.0
        %330 = vmatpush.msra.mxu0 0.0
        %331 = vmatpush.msra.mxu0 0.0
        %332 = vmatpush.msra.mxu0 0.0
        %333 = vmatpush.msra.mxu0 0.0
        %334 = vmatpush.msra.mxu0 0.0
        %335 = vmatpush.msra.mxu0 0.0
        %336 = vmatpush.msra.mxu0 0.0
        %337 = vmatpush.msra.mxu0 0.0
        %338 = vmatpush.msra.mxu0 0.0
        %339 = vmatpush.msra.mxu0 0.0
        %340 = vmatpush.msra.mxu0 0.0
        %341 = vmatpush.msra.mxu0 %v324
        %342 = vmatpush.msra.mxu0 %v323
        %343 = vmatpush.msra.mxu0 %v322
        %344 = vmatpush.msra.mxu0 %v321
        %345 = vmatmul.f32.gmra.mxu0 %v327
        %v346 = vpop.f32.mrf.mxu0
        %v347 = vadd.f32 0.0, %v346
        %348 = vdwg.mxu0
        %349 = vst.msk [vmem:[#allocation2] sm:$0xff] %vm325, %v347
        %v350 = vld [vmem:[%s4] sm:$0xff]
        %v351 = vld [vmem:[%s4 + $0x8] sm:$0xff]
        %v352 = vld [vmem:[%s4 + $0x10] sm:$0xff]
        %v353 = vld [vmem:[%s4 + $0x18] sm:$0xff]
        %354 = vmatpush.msra.mxu0 0.0
        %355 = vmatpush.msra.mxu0 0.0
        %356 = vmatpush.msra.mxu0 0.0
        %357 = vmatpush.msra.mxu0 0.0
        %358 = vmatpush.msra.mxu0 0.0
        %359 = vmatpush.msra.mxu0 0.0
        %360 = vmatpush.msra.mxu0 0.0
        %361 = vmatpush.msra.mxu0 0.0
        %362 = vmatpush.msra.mxu0 0.0
        %363 = vmatpush.msra.mxu0 0.0
        %364 = vmatpush.msra.mxu0 0.0
        %365 = vmatpush.msra.mxu0 0.0
        %366 = vmatpush.msra.mxu0 %v353
        %367 = vmatpush.msra.mxu0 %v352
        %368 = vmatpush.msra.mxu0 %v351
        %369 = vmatpush.msra.mxu0 %v350
        %370 = vmatmul.f32.gmra.mxu0 %v327
        %v371 = vpop.f32.mrf.mxu0
        %v372 = vadd.f32 0.0, %v371
        %373 = vdwg.mxu0
        %374 = vst.msk [vmem:[#allocation3] sm:$0xff] %vm325, %v372
      $region48: #{tpu_custom_call.1} parent=43 // pred_fallthru
        _
      %v375 = vlaneseq
      %v376 = vand.u32 %v375, 127
      %v377 = vld [vmem:[%s294] sm:$0xff]
      %v378 = vld [vmem:[%s294 + $0x8] sm:$0xff]
      %v379 = vld [vmem:[%s294 + $0x10] sm:$0xff]
      %v380 = vld [vmem:[%s294 + $0x18] sm:$0xff]
      %v381 = vld [vmem:[%s294 + $0x20] sm:$0xff]
      %382 = vset.pattern.permute.xlu0 0
      %383 = vperm.xlu0 %382, %v377
      %v384 = vpop.permute.xlu0 %383
      %385 = vset.pattern.permute.xlu0 0
      %386 = vperm.xlu0 %385, %v378
      %v387 = vpop.permute.xlu0 %386
      %388 = vset.pattern.permute.xlu0 0
      %389 = vperm.xlu0 %388, %v379
      %v390 = vpop.permute.xlu0 %389
      %391 = vset.pattern.permute.xlu0 0
      %392 = vperm.xlu0 %391, %v380
      %v393 = vpop.permute.xlu0 %392
      %394 = vset.pattern.permute.xlu0 0
      %395 = vperm.xlu0 %394, %v381
      %v396 = vpop.permute.xlu0 %395
      %vm397 = vcmp.eq.s32.totalorder %v384, %v376
      %vm398 = vcmp.eq.s32.totalorder %v387, %v376
      %vm399 = vcmp.eq.s32.totalorder %v390, %v376
      %vm400 = vcmp.eq.s32.totalorder %v393, %v376
      %vm401 = vcmp.eq.s32.totalorder %v396, %v376
      %v402 = vsel %vm397, 1, 0
      %v403 = vsel %vm398, 1, 0
      %v404 = vsel %vm399, 1, 0
      %v405 = vsel %vm400, 1, 0
      %v406 = vsel %vm401, 1, 0
      %v407 = vcvt.s32.f32 %v402
      %v408 = vcvt.s32.f32 %v403
      %v409 = vcvt.s32.f32 %v404
      %v410 = vcvt.s32.f32 %v405
      %v411 = vcvt.s32.f32 %v406
      %v412 = vld [vmem:[%s300] sm:$0xff]
      %v413 = vld [vmem:[%s300 + $0x8] sm:$0xff]
      %v414 = vld [vmem:[%s300 + $0x10] sm:$0xff]
      %v415 = vld [vmem:[%s300 + $0x18] sm:$0xff]
      %v416 = vld [vmem:[%s300 + $0x20] sm:$0xff]
      %417 = vset.pattern.permute.xlu0 0
      %418 = vperm.xlu0 %417, %v412
      %v419 = vpop.permute.xlu0 %418
      %420 = vset.pattern.permute.xlu0 0
      %421 = vperm.xlu0 %420, %v413
      %v422 = vpop.permute.xlu0 %421
      %423 = vset.pattern.permute.xlu0 0
      %424 = vperm.xlu0 %423, %v414
      %v425 = vpop.permute.xlu0 %424
      %426 = vset.pattern.permute.xlu0 0
      %427 = vperm.xlu0 %426, %v415
      %v428 = vpop.permute.xlu0 %427
      %429 = vset.pattern.permute.xlu0 0
      %430 = vperm.xlu0 %429, %v416
      %v431 = vpop.permute.xlu0 %430
      %vm432 = vcmp.eq.s32.totalorder %v419, %v376
      %vm433 = vcmp.eq.s32.totalorder %v422, %v376
      %vm434 = vcmp.eq.s32.totalorder %v425, %v376
      %vm435 = vcmp.eq.s32.totalorder %v428, %v376
      %vm436 = vcmp.eq.s32.totalorder %v431, %v376
      %v437 = vsel %vm432, 1, 0
      %v438 = vsel %vm433, 1, 0
      %v439 = vsel %vm434, 1, 0
      %v440 = vsel %vm435, 1, 0
      %v441 = vsel %vm436, 1, 0
      %v442 = vcvt.s32.f32 %v437
      %v443 = vcvt.s32.f32 %v438
      %v444 = vcvt.s32.f32 %v439
      %v445 = vcvt.s32.f32 %v440
      %v446 = vcvt.s32.f32 %v441
      %v447 = vld [vmem:[#allocation2] sm:$0xff]
      %v448 = vld [vmem:[#allocation3] sm:$0xff]
      %vm449 = vcmask 64512
      %v451 = vsel %vm449, %v442, 0
      %v454 = vsel %vm449, %v443, 0
      %v457 = vsel %vm449, %v444, 0
      %v460 = vsel %vm449, %v445, 0
      %v463 = vsel %vm449, %v446, 0
      %465 = vmatpush.msra.mxu0 0.0
      %466 = vmatpush.msra.mxu0 0.0
      %467 = vmatpush.msra.mxu0 0.0
      %468 = vmatpush.msra.mxu0 0.0
      %469 = vmatpush.msra.mxu0 0.0
      %470 = vmatpush.msra.mxu0 0.0
      %471 = vmatpush.msra.mxu0 0.0
      %472 = vmatpush.msra.mxu0 0.0
      %473 = vmatpush.msra.mxu0 0.0
      %474 = vmatpush.msra.mxu0 0.0
      %475 = vmatpush.msra.mxu0 0.0
      %476 = vmatpush.msra.mxu0 0.0
      %477 = vmatpush.msra.mxu0 0.0
      %478 = vmatpush.msra.mxu0 0.0
      %479 = vmatpush.msra.mxu0 0.0
      %480 = vmatpush.msra.mxu0 %v448
      %481 = vmatmul.f32.gmra.mxu0 %v451
      %v482 = vpop.f32.mrf.mxu0
      %v483 = vadd.f32 0.0, %v482
      %484 = vmatmul.f32.gmra.mxu0 %v454
      %v485 = vpop.f32.mrf.mxu0
      %v486 = vadd.f32 0.0, %v485
      %487 = vmatmul.f32.gmra.mxu0 %v457
      %v488 = vpop.f32.mrf.mxu0
      %v489 = vadd.f32 0.0, %v488
      %490 = vmatmul.f32.gmra.mxu0 %v460
      %v491 = vpop.f32.mrf.mxu0
      %v492 = vadd.f32 0.0, %v491
      %493 = vmatmul.f32.gmra.mxu0 %v463
      %v494 = vpop.f32.mrf.mxu0
      %v495 = vadd.f32 0.0, %v494
      %496 = vdwg.mxu0
      %v498 = vsel %vm449, %v407, 0
      %v501 = vsel %vm449, %v408, 0
      %v504 = vsel %vm449, %v409, 0
      %v507 = vsel %vm449, %v410, 0
      %v510 = vsel %vm449, %v411, 0
      %512 = vmatpush.msra.mxu0 0.0
      %513 = vmatpush.msra.mxu0 0.0
      %514 = vmatpush.msra.mxu0 0.0
      %515 = vmatpush.msra.mxu0 0.0
      %516 = vmatpush.msra.mxu0 0.0
      %517 = vmatpush.msra.mxu0 0.0
      %518 = vmatpush.msra.mxu0 0.0
      %519 = vmatpush.msra.mxu0 0.0
      %520 = vmatpush.msra.mxu0 0.0
      %521 = vmatpush.msra.mxu0 0.0
      %522 = vmatpush.msra.mxu0 0.0
      %523 = vmatpush.msra.mxu0 0.0
      %524 = vmatpush.msra.mxu0 0.0
      %525 = vmatpush.msra.mxu0 0.0
      %526 = vmatpush.msra.mxu0 0.0
      %527 = vmatpush.msra.mxu0 %v447
      %528 = vmatmul.f32.gmra.mxu0 %v498
      %v529 = vpop.f32.mrf.mxu0
      %v530 = vadd.f32 %v483, %v529
      %531 = vmatmul.f32.gmra.mxu0 %v501
      %v532 = vpop.f32.mrf.mxu0
      %v533 = vadd.f32 %v486, %v532
      %534 = vmatmul.f32.gmra.mxu0 %v504
      %v535 = vpop.f32.mrf.mxu0
      %v536 = vadd.f32 %v489, %v535
      %537 = vmatmul.f32.gmra.mxu0 %v507
      %v538 = vpop.f32.mrf.mxu0
      %v539 = vadd.f32 %v492, %v538
      %540 = vmatmul.f32.gmra.mxu0 %v510
      %v541 = vpop.f32.mrf.mxu0
      %v542 = vadd.f32 %v495, %v541
      %543 = vdwg.mxu0
      %v544 = vld [vmem:[%s5] sm:$0x1]
      %v546 = vperm.slane %v544, 0
      %v548 = vadd.f32 %v530, %v546
      %v549 = vadd.f32 %v533, %v546
      %v550 = vadd.f32 %v536, %v546
      %v551 = vadd.f32 %v539, %v546
      %v552 = vadd.f32 %v542, %v546
      %v553 = vxor.u32 %v548, 2147483648
      %v554 = vxor.u32 %v549, 2147483648
      %v555 = vxor.u32 %v550, 2147483648
      %v556 = vxor.u32 %v551, 2147483648
      %v557 = vxor.u32 %v552, 2147483648
      %v558 = vmul.f32 %v553, 1.442695
      %v559 = vpow.pop %v558
      %v560 = vmul.f32 %v554, 1.442695
      %v561 = vpow.pop %v560
      %v562 = vmul.f32 %v555, 1.442695
      %v563 = vpow.pop %v562
      %v564 = vmul.f32 %v556, 1.442695
      %v565 = vpow.pop %v564
      %v566 = vmul.f32 %v557, 1.442695
      %v567 = vpow.pop %v566
      %v568 = vadd.f32 %v559, 1.0
      %v569 = vadd.f32 %v561, 1.0
      %v570 = vadd.f32 %v563, 1.0
      %v571 = vadd.f32 %v565, 1.0
      %v572 = vadd.f32 %v567, 1.0
      %v573 = vrcp.pop %v568
      %v574 = vmul.f32 %v568, %v573
      %v575 = vsub.f32 1.0, %v574
      %v576 = vmul.f32 %v573, %v575
      %v577 = vadd.f32 %v573, %v576
      %vm578 = vweird.f32 %v568
      %vm579 = vweird.f32 %v573
      %vm580 = vmor %vm578, %vm579
      %v581 = vsel %vm580, %v573, %v577
      %v582 = vand.u32 2147483647, %v568
      %vm583 = vcmp.eq.f32.partialorder %v582, 8.507059e+37
      %v584 = vand.u32 %v568, 2147483648
      %v585 = vor.u32 1.1754944e-38, %v584
      %v586 = vsel %vm583, %v585, %v581
      %v587 = vmul.f32 1.0, %v586
      %v588 = vrcp.pop %v569
      %v589 = vmul.f32 %v569, %v588
      %v590 = vsub.f32 1.0, %v589
      %v591 = vmul.f32 %v588, %v590
      %v592 = vadd.f32 %v588, %v591
      %vm593 = vweird.f32 %v569
      %vm594 = vweird.f32 %v588
      %vm595 = vmor %vm593, %vm594
      %v596 = vsel %vm595, %v588, %v592
      %v597 = vand.u32 2147483647, %v569
      %vm598 = vcmp.eq.f32.partialorder %v597, 8.507059e+37
      %v599 = vand.u32 %v569, 2147483648
      %v600 = vor.u32 1.1754944e-38, %v599
      %v601 = vsel %vm598, %v600, %v596
      %v602 = vmul.f32 1.0, %v601
      %v603 = vrcp.pop %v570
      %v604 = vmul.f32 %v570, %v603
      %v605 = vsub.f32 1.0, %v604
      %v606 = vmul.f32 %v603, %v605
      %v607 = vadd.f32 %v603, %v606
      %vm608 = vweird.f32 %v570
      %vm609 = vweird.f32 %v603
      %vm610 = vmor %vm608, %vm609
      %v611 = vsel %vm610, %v603, %v607
      %v612 = vand.u32 2147483647, %v570
      %vm613 = vcmp.eq.f32.partialorder %v612, 8.507059e+37
      %v614 = vand.u32 %v570, 2147483648
      %v615 = vor.u32 1.1754944e-38, %v614
      %v616 = vsel %vm613, %v615, %v611
      %v617 = vmul.f32 1.0, %v616
      %v618 = vrcp.pop %v571
      %v619 = vmul.f32 %v571, %v618
      %v620 = vsub.f32 1.0, %v619
      %v621 = vmul.f32 %v618, %v620
      %v622 = vadd.f32 %v618, %v621
      %vm623 = vweird.f32 %v571
      %vm624 = vweird.f32 %v618
      %vm625 = vmor %vm623, %vm624
      %v626 = vsel %vm625, %v618, %v622
      %v627 = vand.u32 2147483647, %v571
      %vm628 = vcmp.eq.f32.partialorder %v627, 8.507059e+37
      %v629 = vand.u32 %v571, 2147483648
      %v630 = vor.u32 1.1754944e-38, %v629
      %v631 = vsel %vm628, %v630, %v626
      %v632 = vmul.f32 1.0, %v631
      %v633 = vrcp.pop %v572
      %v634 = vmul.f32 %v572, %v633
      %v635 = vsub.f32 1.0, %v634
      %v636 = vmul.f32 %v633, %v635
      %v637 = vadd.f32 %v633, %v636
      %vm638 = vweird.f32 %v572
      %vm639 = vweird.f32 %v633
      %vm640 = vmor %vm638, %vm639
      %v641 = vsel %vm640, %v633, %v637
      %v642 = vand.u32 2147483647, %v572
      %vm643 = vcmp.eq.f32.partialorder %v642, 8.507059e+37
      %v644 = vand.u32 %v572, 2147483648
      %v645 = vor.u32 1.1754944e-38, %v644
      %v646 = vsel %vm643, %v645, %v641
      %v647 = vmul.f32 1.0, %v646
      %v648 = vmul.f32 %v548, %v587
      %v649 = vmul.f32 %v549, %v602
      %v650 = vmul.f32 %v550, %v617
      %v651 = vmul.f32 %v551, %v632
      %v652 = vmul.f32 %v552, %v647
      %vm653 = vcmask 261120
      %654 = vst.msk [vmem:[%s314] sm:$0xff] %vm653, %v648
      %655 = vst.msk [vmem:[%s314 + $0x8] sm:$0xff] %vm653, %v649
      %656 = vst.msk [vmem:[%s314 + $0x10] sm:$0xff] %vm653, %v650
      %657 = vst.msk [vmem:[%s314 + $0x18] sm:$0xff] %vm653, %v651
      %658 = vst.msk [vmem:[%s314 + $0x20] sm:$0xff] %vm653, %v652
      %s659 = smul.u32 5, %s22
      %p660 = scmp.lt.s32.totalorder %s21, 1
      %s661 = scalar_select %p660, %s21, 1
      %p662 = scmp.lt.s32.totalorder %s659, 4
      %s663 = scalar_select %p662, %s659, 4
      %s664 = smul.addr %s661, 5
      %s665 = sadd.s32 %s663, %s664
      %s666 = smul.addr %s665, 8
      %s667 = scalar_lea.vmem %s6, %s666
      // Predicated region
      $region49: #{tpu_custom_call.1} parent=43 // pred_check
        %p668 = pneg %p190
      $region50: #{tpu_custom_call.1} parent=43 // pred_check_branch
        %670 = sbr.rel (%p668) target = $region52
      $region51: #{tpu_custom_call.1} parent=43 // pred_region
        %s671 = smul.u32 5, %s22
      $region52: #{tpu_custom_call.1} parent=43 // pred_fallthru
        _
    $region44: #{tpu_custom_call.1} parent=5 // pred_fallthru
      _
    %p672 = scmp.le.s32.totalorder 2, %s12
    // Predicated region
    $region53: #{tpu_custom_call.1} parent=5 // pred_check
      %p673 = pneg %p672
    $region54: #{tpu_custom_call.1} parent=5 // pred_check_branch
      %675 = sbr.rel (%p673) target = $region56
    $region55: #{tpu_custom_call.1} parent=5 // pred_region
      %s676 = ssub.s32 %s12, 2
      // Predicated region
      $region57: #{tpu_custom_call.1} parent=55 // pred_check
        %p677 = pneg %p196
      $region58: #{tpu_custom_call.1} parent=55 // pred_check_branch
        %679 = sbr.rel (%p677) target = $region60
      $region59: #{tpu_custom_call.1} parent=55 // pred_region
        %s680 = smul.u32 5, %s24
        %p681 = scmp.lt.s32.totalorder %s23, 1
        %s682 = scalar_select %p681, %s23, 1
        %p683 = scmp.lt.s32.totalorder %s680, 4
        %s684 = scalar_select %p683, %s680, 4
        %s685 = smul.addr %s682, 5
        %s686 = sadd.s32 %s684, %s685
        %s687 = smul.addr %s686, 8
        %s688 = scalar_lea.vmem %s6, %s687
      $region60: #{tpu_custom_call.1} parent=55 // pred_fallthru
        _
    $region56: #{tpu_custom_call.1} parent=5 // pred_fallthru
      _
  $region6: #{tpu_custom_call.1} parent=0 // loop_footer
    %s16 = sadd.s32 1, %s12
  $region7: #{tpu_custom_call.1} parent=0 // loop_footer_branch
    %11 = sbr.rel target = $region3
  $region8: #{tpu_custom_call.1} parent=0 // loop_exit
    _

</llo_original>
